<compile_context>
chip_gen: v5e
topology: v5e:2x2
jax: 0.10.0
libtpu: 0.0.40
codegen_flags: <defaults>
</compile_context>

<pallas_src>
import jax
import jax.numpy as jnp
from jax import lax
from jax.experimental import pallas as pl
from jax.experimental.pallas import tpu as pltpu


def _round_up(v, m):
    return (v + m - 1) // m * m


def _conv1d_tiled_kernel(x_ref, xh_ref, w_ref, b_ref, o_ref, xw_ref, acc_ref):
    # x_ref : (1, C_in, T)        main input tile (columns [l*T, l*T + T))
    # xh_ref: (1, C_in, HALO)     halo block      (columns [(l+1)*T, ... ))
    # w_ref : (K, C_out, C_in)    per-tap weights (resident, constant index)
    # b_ref : (C_out, 1) f32      bias
    # o_ref : (1, C_out, T)       output tile
    # xw_ref: (C_in, T + HALO)    VMEM scratch: contiguous halo'd window
    # acc_ref: (C_out, T) f32     VMEM scratch accumulator
    K = w_ref.shape[0]
    T = o_ref.shape[2]

    # Assemble the contiguous halo'd window with two lane-aligned, unmasked
    # stores; per-tap reads below are then plain ref-level shifted loads
    # (no per-tap value copies of the whole tile).
    xw_ref[:, :T] = x_ref[0]
    xw_ref[:, T:] = xh_ref[0]

    acc_ref[...] = jnp.dot(w_ref[0], xw_ref[:, pl.ds(0, T)],
                           preferred_element_type=jnp.float32)
    for k in range(1, K):  # K is small & static -> unrolled
        acc_ref[...] += jnp.dot(w_ref[k], xw_ref[:, pl.ds(k, T)],
                                preferred_element_type=jnp.float32)

    # f32 epilogue (bias add), cast only at the final store (v5e-safe).
    o_ref[0] = (acc_ref[...] + b_ref[...]).astype(o_ref.dtype)


def conv_up_1d(x, weight, bias, *, kernel_size, stride, padding,
               output_padding=0, l_tile=512, compute_dtype=None):
    """Forward pass of ConvUp1d.  x: (N, C_in, L)."""
    N, C_in, L = x.shape
    K = kernel_size

    if stride == 1:
        # nn.Conv1d: weight (C_out, C_in, K)
        C_out = weight.shape[0]
        w_conv = weight
        left = padding
        interior = 0
        L_out = L + 2 * padding - K + 1
    else:
        # nn.ConvTranspose1d: weight (C_in, C_out, K).  Equivalent stride-1
        # conv: flip taps, swap in/out channels, zero-dilate x by `stride`,
        # pad (K-1-padding) each side (+ output_padding right; negative pad
        # values crop, matching PyTorch).
        # TODO(synk): polyphase decomposition would avoid reading/multiplying
        # the (stride-1)/stride zero fraction of the dilated input.
        C_out = weight.shape[1]
        w_conv = jnp.flip(weight, axis=-1).transpose(1, 0, 2)  # (C_out,C_in,K)
        left = K - 1 - padding
        interior = stride - 1
        L_out = (L - 1) * stride - 2 * padding + K + output_padding
    assert L_out > 0, "invalid ConvUp1d configuration (non-positive L_out)"

    out_dtype = x.dtype
    if compute_dtype is not None:
        x = x.astype(compute_dtype)
        w_conv = w_conv.astype(compute_dtype)

    # --- tiling ------------------------------------------------------------
    HALO = _round_up(max(K - 1, 1), 128)       # halo block, lane-aligned
    T = min(_round_up(L_out, 128), max(_round_up(l_tile, 128), 128))
    T = _round_up(T, HALO)                     # halo block-index math needs T % HALO == 0
    n_l = pl.cdiv(L_out, T)
    L_pad_total = n_l * T + HALO               # main tiles + trailing halo

    # Dilate + pad + extend to the tiled length in a single lax.pad
    # (negative edge pads crop, covering padding > K-1 for transposed conv).
    # TODO(synk): the padded copy of x is still materialized in HBM by XLA;
    # in-kernel masked halo fill would save one read+write of x.
    L_dil = (L - 1) * (interior + 1) + 1
    high = L_pad_total - L_dil - left
    x_pad = lax.pad(x, jnp.array(0, x.dtype),
                    ((0, 0, 0), (0, 0, 0), (left, high, interior)))

    w_kernel = w_conv.transpose(2, 0, 1)                  # (K, C_out, C_in)
    b_kernel = bias.astype(jnp.float32).reshape(C_out, 1)

    # --- VMEM budget (double-buffered inputs/outputs + scratch) ------------
    isz = jnp.dtype(x_pad.dtype).itemsize
    osz = jnp.dtype(out_dtype).itemsize
    est = (2 * C_in * T * isz + 2 * C_in * HALO * isz          # x tiles
           + 2 * K * C_out * C_in * isz + 2 * C_out * 4        # weights/bias
           + 2 * C_out * T * osz                               # out tiles
           + C_in * (T + HALO) * isz + C_out * T * 4)          # scratch
    vmem_limit = int(min(48 * 2**20, max(32 * 2**20, 2 * est)))

    halo_blk = T // HALO   # block-index stride so halo offset == (l+1)*T

    out_padded = pl.pallas_call(
        _conv1d_tiled_kernel,
        out_shape=jax.ShapeDtypeStruct((N, C_out, n_l * T), out_dtype),
        grid_spec=pltpu.PrefetchScalarGridSpec(
            num_scalar_prefetch=0,
            grid=(N, n_l),
            in_specs=[
                pl.BlockSpec((1, C_in, T), lambda n, l: (n, 0, l)),
                pl.BlockSpec((1, C_in, HALO),
                             lambda n, l: (n, 0, (l + 1) * halo_blk)),
                pl.BlockSpec((K, C_out, C_in), lambda n, l: (0, 0, 0)),
                pl.BlockSpec((C_out, 1), lambda n, l: (0, 0)),
            ],
            out_specs=pl.BlockSpec((1, C_out, T), lambda n, l: (n, 0, l)),
            scratch_shapes=[
                pltpu.VMEM((C_in, T + HALO), x_pad.dtype),
                pltpu.VMEM((C_out, T), jnp.float32),
            ]),
        compiler_params=pltpu.CompilerParams(
            dimension_semantics=("parallel", "parallel"),
            vmem_limit_bytes=vmem_limit),
    )(x_pad, x_pad, w_kernel, b_kernel)

    if n_l * T != L_out:
        out_padded = out_padded[:, :, :L_out]
    return out_padded


def _reference(x, weight, bias, *, kernel_size, stride, padding,
               output_padding=0):
    """Pure-JAX reference (im2col einsum) for sanity checking."""
    N, C_in, L = x.shape
    K = kernel_size
    if stride == 1:
        w_conv = weight
        x_pad = jnp.pad(x, ((0, 0), (0, 0), (padding, padding)))
        L_out = L + 2 * padding - K + 1
    else:
        w_conv = jnp.flip(weight, axis=-1).transpose(1, 0, 2)
        L_up = (L - 1) * stride + 1
        x_up = jnp.zeros((N, C_in, L_up), x.dtype).at[:, :, ::stride].set(x)
        lft = K - 1 - padding
        rgt = K - 1 - padding + output_padding
        x_pad = jnp.pad(x_up, ((0, 0), (0, 0), (lft, rgt)))
        L_out = (L - 1) * stride - 2 * padding + K + output_padding
    cols = jnp.stack([x_pad[:, :, k:k + L_out] for k in range(K)], axis=-1)
    return jnp.einsum('oik,nilk->nol', w_conv, cols) + bias[None, :, None]


if __name__ == "__main__":
    key = jax.random.PRNGKey(0)
    k_x, k_wt, k_bt, k_wc, k_bc = jax.random.split(key, 5)

    N, C_in, C_out, L = 2, 4, 8, 16
    x = jax.random.normal(k_x, (N, C_in, L), dtype=jnp.float32)

    # --- ConvTranspose1d path (stride > 1): the "up" in ConvUp1d ------------
    kt, st, pt, opt = 4, 2, 1, 0
    w_t = 0.1 * jax.random.normal(k_wt, (C_in, C_out, kt), dtype=jnp.float32)
    b_t = 0.1 * jax.random.normal(k_bt, (C_out,), dtype=jnp.float32)
    out_t = conv_up_1d(x, w_t, b_t, kernel_size=kt, stride=st, padding=pt,
                       output_padding=opt)
    jax.block_until_ready(out_t)
    ref_t = _reference(x, w_t, b_t, kernel_size=kt, stride=st, padding=pt,
                       output_padding=opt)
    assert out_t.shape == (N, C_out, (L - 1) * st - 2 * pt + kt + opt)
    assert jnp.max(jnp.abs(out_t - ref_t)) < 1e-4

    # --- Conv1d path (stride == 1) ------------------------------------------
    kc, sc, pc = 3, 1, 1
    w_c = 0.1 * jax.random.normal(k_wc, (C_out, C_in, kc), dtype=jnp.float32)
    b_c = 0.1 * jax.random.normal(k_bc, (C_out,), dtype=jnp.float32)
    out_c = conv_up_1d(x, w_c, b_c, kernel_size=kc, stride=sc, padding=pc)
    jax.block_until_ready(out_c)
    ref_c = _reference(x, w_c, b_c, kernel_size=kc, stride=sc, padding=pc)
    assert out_c.shape == (N, C_out, L + 2 * pc - kc + 1)
    assert jnp.max(jnp.abs(out_c - ref_c)) < 1e-4

    # --- bf16 compute path (v6e/v7x MXU/HBM lever), f32 accumulation --------
    out_bf = conv_up_1d(x, w_c, b_c, kernel_size=kc, stride=sc, padding=pc,
                        compute_dtype=jnp.bfloat16)
    jax.block_until_ready(out_bf)
    assert jnp.max(jnp.abs(out_bf - ref_c)) < 5e-2

    print("KERNEL_OK")
</pallas_src>

<mosaic_0001>
module attributes {stable_mosaic.version = 11 : i64} {
  func.func @_conv1d_tiled_kernel(%arg0: i32, %arg1: i32, %arg2: memref<1x4x128xf32, #tpu.memory_space<vmem>>, %arg3: memref<1x4x128xf32, #tpu.memory_space<vmem>>, %arg4: memref<4x8x4xf32, #tpu.memory_space<vmem>>, %arg5: memref<8x1xf32, #tpu.memory_space<vmem>>, %arg6: memref<1x8x128xf32, #tpu.memory_space<vmem>>, %arg7: memref<4x256xf32, #tpu.memory_space<vmem>>, %arg8: memref<8x128xf32, #tpu.memory_space<vmem>>) attributes {dimension_semantics = [#tpu.dimension_semantics<parallel>, #tpu.dimension_semantics<parallel>], iteration_bounds = array<i64: 2, 1>, scalar_prefetch = 0 : i64, scratch_operands = 2 : i64, tpu.core_type = #tpu.core_type<tc>, window_params = [{transform_indices = @transform_0, window_bounds = array<i64: 1, 4, 128>}, {transform_indices = @transform_1, window_bounds = array<i64: 1, 4, 128>}, {pipeline_mode = #tpu.pipeline_mode<synchronous>, transform_indices = @transform_2, window_bounds = array<i64: 4, 8, 4>}, {pipeline_mode = #tpu.pipeline_mode<synchronous>, transform_indices = @transform_3, window_bounds = array<i64: 8, 1>}, {transform_indices = @transform_4, window_bounds = array<i64: 1, 8, 128>}]} {
    %c0 = arith.constant 0 : index
    %c0_0 = arith.constant 0 : index
    %c0_1 = arith.constant 0 : index
    %0 = vector.load %arg2[%c0, %c0_0, %c0_1] : memref<1x4x128xf32, #tpu.memory_space<vmem>>, vector<1x4x128xf32>
    %1 = vector.shape_cast %0 : vector<1x4x128xf32> to vector<4x128xf32>
    %c0_2 = arith.constant 0 : index
    %c0_3 = arith.constant 0 : index
    %2 = vector.load %arg7[%c0_2, %c0_3] : memref<4x256xf32, #tpu.memory_space<vmem>>, vector<4x128xf32>
    tpu.vector_store %arg7[%c0_2, %c0_3], %1 {strides = array<i32>} : memref<4x256xf32, #tpu.memory_space<vmem>>, vector<4x128xf32>,
    %c0_4 = arith.constant 0 : index
    %c0_5 = arith.constant 0 : index
    %c0_6 = arith.constant 0 : index
    %3 = vector.load %arg3[%c0_4, %c0_5, %c0_6] : memref<1x4x128xf32, #tpu.memory_space<vmem>>, vector<1x4x128xf32>
    %4 = vector.shape_cast %3 : vector<1x4x128xf32> to vector<4x128xf32>
    %c0_7 = arith.constant 0 : index
    %c128 = arith.constant 128 : index
    %5 = vector.load %arg7[%c0_7, %c128] : memref<4x256xf32, #tpu.memory_space<vmem>>, vector<4x128xf32>
    tpu.vector_store %arg7[%c0_7, %c128], %4 {strides = array<i32>} : memref<4x256xf32, #tpu.memory_space<vmem>>, vector<4x128xf32>,
    %c0_8 = arith.constant 0 : index
    %c0_9 = arith.constant 0 : index
    %c0_10 = arith.constant 0 : index
    %6 = vector.load %arg4[%c0_8, %c0_9, %c0_10] : memref<4x8x4xf32, #tpu.memory_space<vmem>>, vector<1x8x4xf32>
    %7 = vector.shape_cast %6 : vector<1x8x4xf32> to vector<8x4xf32>
    %c0_11 = arith.constant 0 : index
    %c0_12 = arith.constant 0 : index
    %8 = vector.load %arg7[%c0_11, %c0_12] : memref<4x256xf32, #tpu.memory_space<vmem>>, vector<4x128xf32>
    %cst = arith.constant dense<0.000000e+00> : vector<8x128xf32>
    %9 = tpu.matmul %7, %8, %cst {dimension_numbers = #tpu.dot_dimension_numbers<[1], [0], [0], [1], [0, 0, 1, 1], [], []>} : vector<8x4xf32>, vector<4x128xf32>, vector<8x128xf32> -> vector<8x128xf32>
    %c0_13 = arith.constant 0 : index
    %c0_14 = arith.constant 0 : index
    %10 = vector.load %arg8[%c0_13, %c0_14] : memref<8x128xf32, #tpu.memory_space<vmem>>, vector<8x128xf32>
    tpu.vector_store %arg8[%c0_13, %c0_14], %9 {strides = array<i32>} : memref<8x128xf32, #tpu.memory_space<vmem>>, vector<8x128xf32>,
    %c0_15 = arith.constant 0 : index
    %c0_16 = arith.constant 0 : index
    %11 = vector.load %arg8[%c0_15, %c0_16] : memref<8x128xf32, #tpu.memory_space<vmem>>, vector<8x128xf32>
    %c1 = arith.constant 1 : index
    %c0_17 = arith.constant 0 : index
    %c0_18 = arith.constant 0 : index
    %12 = vector.load %arg4[%c1, %c0_17, %c0_18] : memref<4x8x4xf32, #tpu.memory_space<vmem>>, vector<1x8x4xf32>
    %13 = vector.shape_cast %12 : vector<1x8x4xf32> to vector<8x4xf32>
    %c0_19 = arith.constant 0 : index
    %c1_20 = arith.constant 1 : index
    %14 = vector.load %arg7[%c0_19, %c1_20] : memref<4x256xf32, #tpu.memory_space<vmem>>, vector<4x128xf32>
    %cst_21 = arith.constant dense<0.000000e+00> : vector<8x128xf32>
    %15 = tpu.matmul %13, %14, %cst_21 {dimension_numbers = #tpu.dot_dimension_numbers<[1], [0], [0], [1], [0, 0, 1, 1], [], []>} : vector<8x4xf32>, vector<4x128xf32>, vector<8x128xf32> -> vector<8x128xf32>
    %16 = arith.addf %11, %15 : vector<8x128xf32>
    %c0_22 = arith.constant 0 : index
    %c0_23 = arith.constant 0 : index
    %17 = vector.load %arg8[%c0_22, %c0_23] : memref<8x128xf32, #tpu.memory_space<vmem>>, vector<8x128xf32>
    tpu.vector_store %arg8[%c0_22, %c0_23], %16 {strides = array<i32>} : memref<8x128xf32, #tpu.memory_space<vmem>>, vector<8x128xf32>,
    %c0_24 = arith.constant 0 : index
    %c0_25 = arith.constant 0 : index
    %18 = vector.load %arg8[%c0_24, %c0_25] : memref<8x128xf32, #tpu.memory_space<vmem>>, vector<8x128xf32>
    %c2 = arith.constant 2 : index
    %c0_26 = arith.constant 0 : index
    %c0_27 = arith.constant 0 : index
    %19 = vector.load %arg4[%c2, %c0_26, %c0_27] : memref<4x8x4xf32, #tpu.memory_space<vmem>>, vector<1x8x4xf32>
    %20 = vector.shape_cast %19 : vector<1x8x4xf32> to vector<8x4xf32>
    %c0_28 = arith.constant 0 : index
    %c2_29 = arith.constant 2 : index
    %21 = vector.load %arg7[%c0_28, %c2_29] : memref<4x256xf32, #tpu.memory_space<vmem>>, vector<4x128xf32>
    %cst_30 = arith.constant dense<0.000000e+00> : vector<8x128xf32>
    %22 = tpu.matmul %20, %21, %cst_30 {dimension_numbers = #tpu.dot_dimension_numbers<[1], [0], [0], [1], [0, 0, 1, 1], [], []>} : vector<8x4xf32>, vector<4x128xf32>, vector<8x128xf32> -> vector<8x128xf32>
    %23 = arith.addf %18, %22 : vector<8x128xf32>
    %c0_31 = arith.constant 0 : index
    %c0_32 = arith.constant 0 : index
    %24 = vector.load %arg8[%c0_31, %c0_32] : memref<8x128xf32, #tpu.memory_space<vmem>>, vector<8x128xf32>
    tpu.vector_store %arg8[%c0_31, %c0_32], %23 {strides = array<i32>} : memref<8x128xf32, #tpu.memory_space<vmem>>, vector<8x128xf32>,
    %c0_33 = arith.constant 0 : index
    %c0_34 = arith.constant 0 : index
    %25 = vector.load %arg8[%c0_33, %c0_34] : memref<8x128xf32, #tpu.memory_space<vmem>>, vector<8x128xf32>
    %c3 = arith.constant 3 : index
    %c0_35 = arith.constant 0 : index
    %c0_36 = arith.constant 0 : index
    %26 = vector.load %arg4[%c3, %c0_35, %c0_36] : memref<4x8x4xf32, #tpu.memory_space<vmem>>, vector<1x8x4xf32>
    %27 = vector.shape_cast %26 : vector<1x8x4xf32> to vector<8x4xf32>
    %c0_37 = arith.constant 0 : index
    %c3_38 = arith.constant 3 : index
    %28 = vector.load %arg7[%c0_37, %c3_38] : memref<4x256xf32, #tpu.memory_space<vmem>>, vector<4x128xf32>
    %cst_39 = arith.constant dense<0.000000e+00> : vector<8x128xf32>
    %29 = tpu.matmul %27, %28, %cst_39 {dimension_numbers = #tpu.dot_dimension_numbers<[1], [0], [0], [1], [0, 0, 1, 1], [], []>} : vector<8x4xf32>, vector<4x128xf32>, vector<8x128xf32> -> vector<8x128xf32>
    %30 = arith.addf %25, %29 : vector<8x128xf32>
    %c0_40 = arith.constant 0 : index
    %c0_41 = arith.constant 0 : index
    %31 = vector.load %arg8[%c0_40, %c0_41] : memref<8x128xf32, #tpu.memory_space<vmem>>, vector<8x128xf32>
    tpu.vector_store %arg8[%c0_40, %c0_41], %30 {strides = array<i32>} : memref<8x128xf32, #tpu.memory_space<vmem>>, vector<8x128xf32>,
    %c0_42 = arith.constant 0 : index
    %c0_43 = arith.constant 0 : index
    %32 = vector.load %arg8[%c0_42, %c0_43] : memref<8x128xf32, #tpu.memory_space<vmem>>, vector<8x128xf32>
    %c0_44 = arith.constant 0 : index
    %c0_45 = arith.constant 0 : index
    %33 = vector.load %arg5[%c0_44, %c0_45] : memref<8x1xf32, #tpu.memory_space<vmem>>, vector<8x1xf32>
    %34 = vector.broadcast %33 : vector<8x1xf32> to vector<8x128xf32>
    %35 = arith.addf %32, %34 : vector<8x128xf32>
    %c0_46 = arith.constant 0 : index
    %c0_47 = arith.constant 0 : index
    %c0_48 = arith.constant 0 : index
    %36 = vector.load %arg6[%c0_46, %c0_47, %c0_48] : memref<1x8x128xf32, #tpu.memory_space<vmem>>, vector<1x8x128xf32>
    %37 = vector.shape_cast %36 : vector<1x8x128xf32> to vector<8x128xf32>
    %38 = vector.shape_cast %35 : vector<8x128xf32> to vector<1x8x128xf32>
    tpu.vector_store %arg6[%c0_46, %c0_47, %c0_48], %38 {strides = array<i32>} : memref<1x8x128xf32, #tpu.memory_space<vmem>>, vector<1x8x128xf32>,
    return
  }
  func.func @transform_0(%arg0: i32, %arg1: i32) -> (i32, i32, i32) {
    %c0_i32 = arith.constant 0 : i32
    %c0_i32_0 = arith.constant 0 : i32
    return %arg0, %c0_i32, %arg1 : i32, i32, i32
  }
  func.func @transform_1(%arg0: i32, %arg1: i32) -> (i32, i32, i32) {
    %c1_i32 = arith.constant 1 : i32
    %0 = arith.addi %arg1, %c1_i32 : i32
    %c1_i32_0 = arith.constant 1 : i32
    %1 = arith.muli %0, %c1_i32_0 : i32
    %c0_i32 = arith.constant 0 : i32
    %c0_i32_1 = arith.constant 0 : i32
    return %arg0, %c0_i32, %1 : i32, i32, i32
  }
  func.func @transform_2(%arg0: i32, %arg1: i32) -> (i32, i32, i32) {
    %c0_i32 = arith.constant 0 : i32
    %c0_i32_0 = arith.constant 0 : i32
    %c0_i32_1 = arith.constant 0 : i32
    %c0_i32_2 = arith.constant 0 : i32
    return %c0_i32, %c0_i32_0, %c0_i32_1 : i32, i32, i32
  }
  func.func @transform_3(%arg0: i32, %arg1: i32) -> (i32, i32) {
    %c0_i32 = arith.constant 0 : i32
    %c0_i32_0 = arith.constant 0 : i32
    %c0_i32_1 = arith.constant 0 : i32
    return %c0_i32, %c0_i32_0 : i32, i32
  }
  func.func @transform_4(%arg0: i32, %arg1: i32) -> (i32, i32, i32) {
    %c0_i32 = arith.constant 0 : i32
    %c0_i32_0 = arith.constant 0 : i32
    return %arg0, %c0_i32, %arg1 : i32, i32, i32
  }
}

</mosaic_0001>

<llo_original>
// kernel: tpu_custom_call.1
$region0: #{tpu_custom_call.1}
  #allocation0 [shape = 'u32[]', space=smem, size = 0x4, offset = 0x4, fixed_abs, tag = 'smem constant byte address 0x4 - core index']
  #allocation1 [shape = 'u32[72,128]{1,0:T(1,128)}', space=vmem, size = 0x9000, scoped, tag = 'internal scratch']
  #allocation2 [shape = 'f32[4,256]{1,0:T(4,128)}', space=vmem, size = 0x1000, scoped, tag = 'scratch operand']
  #allocation3 [shape = 'f32[8,128]{1,0:T(8,128)}', space=vmem, size = 0x1000, scoped, tag = 'scratch operand']
  %s0 = inlined_call_operand.vmem [shape: f32[2,4,256], index: 0, kind: input, shape index: {}]
  %s1 = inlined_call_operand.vmem [shape: f32[2,4,256], index: 1, kind: input, shape index: {}]
  %s2 = inlined_call_operand.vmem [shape: f32[4,8,4], index: 2, kind: input, shape index: {}]
  %s3 = inlined_call_operand.vmem [shape: f32[8,1], index: 3, kind: input, shape index: {}]
  %s4 = inlined_call_operand.hbm [shape: f32[2,8,128], index: 4, kind: output, shape index: {}]
  %s5 = sld [smem:[#allocation0]]
  $region49: #{tpu_custom_call.1} parent=0
    _
  %s7 = ssub.s32 1, %s5
  %s8 = scalar_select 0, %s7, %s5
  $region1: #{tpu_custom_call.1} parent=0
    #allocation4 [shape = 'u8[8192]{0}', space=vmem, size = 0x2000, scoped, tag = 'output window, operand 0']
    #allocation5 [shape = 's32[2]{0}', space=sflag, size = 0x8, scoped, tag = 'scoped memory for tpu_custom_call.1']
    %9 = vsyncpa [#allocation5], 0
    %s10 = scalar_lea.sflag [#allocation5], 1
    %11 = vsyncpa %s10, 0
    loop: start=0, step=1, limit=4
    $region2: #{tpu_custom_call.1} parent=1 // loop_pre_header
      _
    $region3: #{tpu_custom_call.1} parent=1 // loop_header
      %s13 = sphi 0, %s17
      %p14 = scmp.ge.s32.totalorder %s13, 4
      %s20 = sphi 0, %s32
      %s21 = sphi 0, %s28
      %s22 = sphi 0, %s20
      %s23 = sphi 0, %s21
      %s24 = sphi 0, %s22
      %s25 = sphi 0, %s23
      %s37 = sphi 0, %s39
      %s40 = sphi 0, %s37
      %s41 = sphi 0, %s40
      %s57 = sphi 0, %s41
      %s67 = sphi 0, %s69
      %s70 = sphi 0, %s67
      %s71 = sphi 0, %s70
      %s87 = sphi 0, %s71
      %s91 = sphi 0, %s91
      %s93 = sphi 0, %s91
      %s94 = sphi 0, %s93
      %s108 = sphi 0, %s94
      %s112 = sphi 0, %s112
      %s114 = sphi 0, %s112
      %s115 = sphi 0, %s114
      %s129 = sphi 0, %s115
      %s137 = sphi 0, %s139
      %s140 = sphi 0, %s137
      %s141 = sphi 0, %s140
      %s157 = sphi 0, %s141
    $region4: #{tpu_custom_call.1} parent=1 // loop_header_branch
      %16 = sbr.rel (%p14) target = $region8
    $region5: #{tpu_custom_call.1} parent=1 // loop_body
      %s18 = ssub.s32 %s13, 1
      %s19 = ssub.s32 %s13, 2
      %s26 = sadd.s32 1, %s21
      %p27 = scmp.ge.s32.totalorder %s26, 1
      %s28 = scalar_select %p27, 0, %s26
      %s29 = sadd.s32 1, %s20
      %s30 = scalar_select %p27, %s29, %s20
      %p31 = scmp.ge.s32.totalorder %s30, 2
      %s32 = scalar_select %p31, 0, %s30
      %s33 = ssub.s32 %s20, %s32
      %s34 = ssub.s32 %s21, %s28
      %s35 = sor.u32 %s33, %s34
      %p36 = scmp.eq.s32.totalorder %s35, 0
      %s38 = sadd.s32 %s37, 1
      %s39 = scalar_select %p36, %s37, %s38
      %p42 = pneg %p36
      %p43 = scmp.eq.s32.totalorder %s13, 1
      %p44 = por %p42, %p43
      %p45 = scmp.ne.s32.totalorder %s37, %s40
      %p46 = scmp.eq.s32.totalorder %s13, 0
      %p47 = por %p45, %p46
      %p48 = scmp.ne.s32.totalorder %s37, %s40
      %p49 = scmp.eq.s32.totalorder %s18, 1
      %p50 = por %p48, %p49
      %p51 = scmp.ne.s32.totalorder %s40, %s41
      %p52 = scmp.eq.s32.totalorder %s18, 0
      %p53 = por %p51, %p52
      %p54 = scmp.ne.s32.totalorder %s40, %s41
      %p55 = scmp.eq.s32.totalorder %s19, 1
      %p56 = por %p54, %p55
      %p58 = scmp.ne.s32.totalorder %s41, %s57
      %p59 = scmp.eq.s32.totalorder %s19, 0
      %p60 = por %p58, %p59
      %s61 = sadd.s32 %s21, 1
      %s62 = sadd.s32 %s28, 1
      %s63 = ssub.s32 %s20, %s32
      %s64 = ssub.s32 %s61, %s62
      %s65 = sor.u32 %s63, %s64
      %p66 = scmp.eq.s32.totalorder %s65, 0
      %s68 = sadd.s32 %s67, 1
      %s69 = scalar_select %p66, %s67, %s68
      %p72 = pneg %p66
      %p73 = scmp.eq.s32.totalorder %s13, 1
      %p74 = por %p72, %p73
      %p75 = scmp.ne.s32.totalorder %s67, %s70
      %p76 = scmp.eq.s32.totalorder %s13, 0
      %p77 = por %p75, %p76
      %p78 = scmp.ne.s32.totalorder %s67, %s70
      %p79 = scmp.eq.s32.totalorder %s18, 1
      %p80 = por %p78, %p79
      %p81 = scmp.ne.s32.totalorder %s70, %s71
      %p82 = scmp.eq.s32.totalorder %s18, 0
      %p83 = por %p81, %p82
      %p84 = scmp.ne.s32.totalorder %s70, %s71
      %p85 = scmp.eq.s32.totalorder %s19, 1
      %p86 = por %p84, %p85
      %p88 = scmp.ne.s32.totalorder %s71, %s87
      %p89 = scmp.eq.s32.totalorder %s19, 0
      %p90 = por %p88, %p89
      %s92 = sadd.s32 %s91, 1
      %p95 = scmp.eq.s32.totalorder %s13, 1
      %p96 = scmp.ne.s32.totalorder %s91, %s93
      %p97 = scmp.eq.s32.totalorder %s13, 0
      %p98 = por %p96, %p97
      %p99 = scmp.ne.s32.totalorder %s91, %s93
      %p100 = scmp.eq.s32.totalorder %s18, 1
      %p101 = por %p99, %p100
      %p102 = scmp.ne.s32.totalorder %s93, %s94
      %p103 = scmp.eq.s32.totalorder %s18, 0
      %p104 = por %p102, %p103
      %p105 = scmp.ne.s32.totalorder %s93, %s94
      %p106 = scmp.eq.s32.totalorder %s19, 1
      %p107 = por %p105, %p106
      %p109 = scmp.ne.s32.totalorder %s94, %s108
      %p110 = scmp.eq.s32.totalorder %s19, 0
      %p111 = por %p109, %p110
      %s113 = sadd.s32 %s112, 1
      %p116 = scmp.eq.s32.totalorder %s13, 1
      %p117 = scmp.ne.s32.totalorder %s112, %s114
      %p118 = scmp.eq.s32.totalorder %s13, 0
      %p119 = por %p117, %p118
      %p120 = scmp.ne.s32.totalorder %s112, %s114
      %p121 = scmp.eq.s32.totalorder %s18, 1
      %p122 = por %p120, %p121
      %p123 = scmp.ne.s32.totalorder %s114, %s115
      %p124 = scmp.eq.s32.totalorder %s18, 0
      %p125 = por %p123, %p124
      %p126 = scmp.ne.s32.totalorder %s114, %s115
      %p127 = scmp.eq.s32.totalorder %s19, 1
      %p128 = por %p126, %p127
      %p130 = scmp.ne.s32.totalorder %s115, %s129
      %p131 = scmp.eq.s32.totalorder %s19, 0
      %p132 = por %p130, %p131
      %s133 = ssub.s32 %s20, %s32
      %s134 = ssub.s32 %s21, %s28
      %s135 = sor.u32 %s133, %s134
      %p136 = scmp.eq.s32.totalorder %s135, 0
      %s138 = sadd.s32 %s137, 1
      %s139 = scalar_select %p136, %s137, %s138
      %p142 = pneg %p136
      %p143 = scmp.eq.s32.totalorder %s13, 1
      %p144 = por %p142, %p143
      %p145 = scmp.ne.s32.totalorder %s137, %s140
      %p146 = scmp.eq.s32.totalorder %s13, 0
      %p147 = por %p145, %p146
      %p148 = scmp.ne.s32.totalorder %s137, %s140
      %p149 = scmp.eq.s32.totalorder %s18, 1
      %p150 = por %p148, %p149
      %p151 = scmp.ne.s32.totalorder %s140, %s141
      %p152 = scmp.eq.s32.totalorder %s18, 0
      %p153 = por %p151, %p152
      %p154 = scmp.ne.s32.totalorder %s140, %s141
      %p155 = scmp.eq.s32.totalorder %s19, 1
      %p156 = por %p154, %p155
      %p158 = scmp.ne.s32.totalorder %s141, %s157
      %p159 = scmp.eq.s32.totalorder %s19, 0
      %p160 = por %p158, %p159
      %p161 = scmp.le.s32.totalorder 1, %s13
      %p162 = scmp.lt.s32.totalorder %s13, 3
      %p163 = pnand %p161, %p162
      %p164 = pneg %p163
      // Predicated region
      $region9: #{tpu_custom_call.1} parent=5 // pred_check
        _
      $region10: #{tpu_custom_call.1} parent=5 // pred_check_branch
        %166 = sbr.rel (%p163) target = $region12
      $region11: #{tpu_custom_call.1} parent=5 // pred_region
        %s167 = ssub.s32 %s13, 1
        // Predicated region
        $region13: #{tpu_custom_call.1} parent=11 // pred_check
          %p168 = pneg %p104
        $region14: #{tpu_custom_call.1} parent=11 // pred_check_branch
          %170 = sbr.rel (%p168) target = $region16
        $region15: #{tpu_custom_call.1} parent=11 // pred_region
          _
        $region16: #{tpu_custom_call.1} parent=11 // pred_fallthru
          _
        // Predicated region
        $region17: #{tpu_custom_call.1} parent=11 // pred_check
          %p171 = pneg %p125
        $region18: #{tpu_custom_call.1} parent=11 // pred_check_branch
          %173 = sbr.rel (%p171) target = $region20
        $region19: #{tpu_custom_call.1} parent=11 // pred_region
          _
        $region20: #{tpu_custom_call.1} parent=11 // pred_fallthru
          _
      $region12: #{tpu_custom_call.1} parent=5 // pred_fallthru
        _
      %p174 = scmp.lt.s32.totalorder %s13, 2
      // Predicated region
      $region21: #{tpu_custom_call.1} parent=5 // pred_check
        %p175 = pneg %p174
      $region22: #{tpu_custom_call.1} parent=5 // pred_check_branch
        %177 = sbr.rel (%p175) target = $region24
      $region23: #{tpu_custom_call.1} parent=5 // pred_region
        // Predicated region
        $region25: #{tpu_custom_call.1} parent=23 // pred_check
          %p178 = pneg %p47
        $region26: #{tpu_custom_call.1} parent=23 // pred_check_branch
          %180 = sbr.rel (%p178) target = $region28
        $region27: #{tpu_custom_call.1} parent=23 // pred_region
          %p181 = scmp.lt.s32.totalorder %s20, 1
          %s182 = scalar_select %p181, %s20, 1
          %p183 = scmp.lt.s32.totalorder %s21, 1
          %s184 = scalar_select %p183, %s21, 1
          %s185 = smul.addr %s182, 2
          %s186 = sadd.s32 %s184, %s185
          %s187 = smul.addr %s186, 4
          %s188 = scalar_lea.vmem %s0, %s187
        $region28: #{tpu_custom_call.1} parent=23 // pred_fallthru
          _
        // Predicated region
        $region29: #{tpu_custom_call.1} parent=23 // pred_check
          %p189 = pneg %p77
        $region30: #{tpu_custom_call.1} parent=23 // pred_check_branch
          %191 = sbr.rel (%p189) target = $region32
        $region31: #{tpu_custom_call.1} parent=23 // pred_region
          %s192 = sadd.s32 %s21, 1
          %p193 = scmp.lt.s32.totalorder %s20, 1
          %s194 = scalar_select %p193, %s20, 1
          %p195 = scmp.lt.s32.totalorder %s192, 1
          %s196 = scalar_select %p195, %s192, 1
          %s197 = smul.addr %s194, 2
          %s198 = sadd.s32 %s196, %s197
          %s199 = smul.addr %s198, 4
          %s200 = scalar_lea.vmem %s1, %s199
          %s201 = sadd.s32 %s21, 1
        $region32: #{tpu_custom_call.1} parent=23 // pred_fallthru
          _
      $region24: #{tpu_custom_call.1} parent=5 // pred_fallthru
        _
      %p202 = scmp.le.s32.totalorder 1, %s13
      %p203 = scmp.lt.s32.totalorder %s13, 3
      %p204 = pnand %p202, %p203
      %p205 = pneg %p204
      // Predicated region
      $region33: #{tpu_custom_call.1} parent=5 // pred_check
        _
      $region34: #{tpu_custom_call.1} parent=5 // pred_check_branch
        %207 = sbr.rel (%p204) target = $region36
      $region35: #{tpu_custom_call.1} parent=5 // pred_region
        %s208 = ssub.s32 %s13, 1
        %p209 = scmp.lt.s32.totalorder %s22, 1
        %s210 = scalar_select %p209, %s22, 1
        %p211 = scmp.lt.s32.totalorder %s23, 1
        %s212 = scalar_select %p211, %s23, 1
        %s213 = smul.addr %s210, 2
        %s214 = sadd.s32 %s212, %s213
        %s215 = smul.addr %s214, 4
        %s216 = scalar_lea.vmem %s0, %s215
        %p217 = pneg %p53
        %p218 = pneg %p50
        %s219 = sadd.s32 %s23, 1
        %p220 = scmp.lt.s32.totalorder %s22, 1
        %s221 = scalar_select %p220, %s22, 1
        %p222 = scmp.lt.s32.totalorder %s219, 1
        %s223 = scalar_select %p222, %s219, 1
        %s224 = smul.addr %s221, 2
        %s225 = sadd.s32 %s223, %s224
        %s226 = smul.addr %s225, 4
        %s227 = scalar_lea.vmem %s1, %s226
        %p228 = pneg %p83
        %p229 = pneg %p80
        %p230 = pneg %p104
        %p231 = pneg %p101
        %p232 = pneg %p125
        %p233 = pneg %p122
        %p234 = pneg %p153
        %p235 = pneg %p150
        %s236 = sand.u32 %s140, 1
        %s237 = scalar_lea.sflag [#allocation5], %s236
        %s238 = sand.u32 %s140, 1
        %s239 = smul.addr %s238, 8
        %s240 = scalar_lea.vmem [#allocation4], %s239
        %p241 = scmp.lt.s32.totalorder %s22, 1
        %s242 = scalar_select %p241, %s22, 1
        %p243 = scmp.lt.s32.totalorder %s23, 1
        %s244 = scalar_select %p243, %s23, 1
        %s245 = smul.addr %s242, 2
        %s246 = sadd.s32 %s244, %s245
        %s247 = smul.addr %s246, 4
        %s248 = scalar_lea.vmem %s0, %s247
        %s249 = sadd.s32 %s23, 1
        %p250 = scmp.lt.s32.totalorder %s22, 1
        %s251 = scalar_select %p250, %s22, 1
        %p252 = scmp.lt.s32.totalorder %s249, 1
        %s253 = scalar_select %p252, %s249, 1
        %s254 = smul.addr %s251, 2
        %s255 = sadd.s32 %s253, %s254
        %s256 = smul.addr %s255, 4
        %s257 = scalar_lea.vmem %s1, %s256
        %s258 = sadd.s32 %s23, 1
        %v259 = vld [vmem:[%s248] sm:$0xf]
        %260 = vst [vmem:[#allocation2] sm:$0xf] %v259
        %v261 = vld [vmem:[%s257] sm:$0xf]
        %262 = vst [vmem:[#allocation2 + $0x4] sm:$0xf] %v261
        %v263 = vld [vmem:[%s2] sm:$0xff]
        %v264 = vld [vmem:[#allocation2] sm:$0xf]
        %vm265 = vcmask 31744
        %v267 = vsel %vm265, %v263, 0
        %vm269 = vcmask 1043456
        %v271 = vsel %vm269, %v264, 0
        %273 = vmatpush.msra.mxu0 0.0
        %274 = vmatpush.msra.mxu0 0.0
        %275 = vmatpush.msra.mxu0 0.0
        %276 = vmatpush.msra.mxu0 0.0
        %277 = vmatpush.msra.mxu0 0.0
        %278 = vmatpush.msra.mxu0 0.0
        %279 = vmatpush.msra.mxu0 0.0
        %280 = vmatpush.msra.mxu0 0.0
        %281 = vmatpush.msra.mxu0 0.0
        %282 = vmatpush.msra.mxu0 0.0
        %283 = vmatpush.msra.mxu0 0.0
        %284 = vmatpush.msra.mxu0 0.0
        %285 = vmatpush.msra.mxu0 0.0
        %286 = vmatpush.msra.mxu0 0.0
        %287 = vmatpush.msra.mxu0 0.0
        %288 = vmatpush.msra.mxu0 %v271
        %289 = vmatmul.f32.gmra.mxu0 %v267
        %v290 = vpop.f32.mrf.mxu0
        %v291 = vadd.f32 0.0, %v290
        %292 = vdwg.mxu0
        %293 = vst [vmem:[#allocation3] sm:$0xff] %v291
        %v294 = vld [vmem:[#allocation3] sm:$0xff]
        %s295 = scalar_lea.vmem %s2, 8
        %v296 = vld [vmem:[%s295] sm:$0xff]
        %v297 = vld [vmem:[#allocation2] sm:$0xff]
        %299 = vst [vmem:[#allocation1] ss:$2 sm:$0xff] %v297
        %v300 = vld.sshfl [vmem:[#allocation1] sm:$0xff pattern:$0x75316420]
        %v301 = vld.sshfl [vmem:[#allocation1 + $0x8] sm:$0xff pattern:$0x75316420]
        %302 = vrot.lane.b32.xlu0 %v300, 127
        %v303 = vpop.permute.xlu0 %302
        %304 = vrot.lane.b32.xlu0 %v301, 127
        %v305 = vpop.permute.xlu0 %304
        %vm306 = vcmask 1039360
        %v307 = vsel %vm306, %v303, %v305
        %v309 = vsel %vm265, %v296, 0
        %v311 = vsel %vm269, %v307, 0
        %313 = vmatpush.msra.mxu0 0.0
        %314 = vmatpush.msra.mxu0 0.0
        %315 = vmatpush.msra.mxu0 0.0
        %316 = vmatpush.msra.mxu0 0.0
        %317 = vmatpush.msra.mxu0 0.0
        %318 = vmatpush.msra.mxu0 0.0
        %319 = vmatpush.msra.mxu0 0.0
        %320 = vmatpush.msra.mxu0 0.0
        %321 = vmatpush.msra.mxu0 0.0
        %322 = vmatpush.msra.mxu0 0.0
        %323 = vmatpush.msra.mxu0 0.0
        %324 = vmatpush.msra.mxu0 0.0
        %325 = vmatpush.msra.mxu0 0.0
        %326 = vmatpush.msra.mxu0 0.0
        %327 = vmatpush.msra.mxu0 0.0
        %328 = vmatpush.msra.mxu0 %v311
        %329 = vmatmul.f32.gmra.mxu0 %v309
        %v330 = vpop.f32.mrf.mxu0
        %v331 = vadd.f32 0.0, %v330
        %332 = vdwg.mxu0
        %v333 = vadd.f32 %v294, %v331
        %334 = vst [vmem:[#allocation3] sm:$0xff] %v333
        %v335 = vld [vmem:[#allocation3] sm:$0xff]
        %s336 = scalar_lea.vmem %s2, 16
        %v337 = vld [vmem:[%s336] sm:$0xff]
        %v338 = vld [vmem:[#allocation2] sm:$0xff]
        %340 = vst [vmem:[#allocation1] ss:$2 sm:$0xff] %v338
        %v341 = vld.sshfl [vmem:[#allocation1] sm:$0xff pattern:$0x75316420]
        %v342 = vld.sshfl [vmem:[#allocation1 + $0x8] sm:$0xff pattern:$0x75316420]
        %343 = vrot.lane.b32.xlu0 %v341, 126
        %v344 = vpop.permute.xlu0 %343
        %345 = vrot.lane.b32.xlu0 %v342, 126
        %v346 = vpop.permute.xlu0 %345
        %vm347 = vcmask 1031168
        %v348 = vsel %vm347, %v344, %v346
        %v350 = vsel %vm265, %v337, 0
        %v352 = vsel %vm269, %v348, 0
        %354 = vmatpush.msra.mxu0 0.0
        %355 = vmatpush.msra.mxu0 0.0
        %356 = vmatpush.msra.mxu0 0.0
        %357 = vmatpush.msra.mxu0 0.0
        %358 = vmatpush.msra.mxu0 0.0
        %359 = vmatpush.msra.mxu0 0.0
        %360 = vmatpush.msra.mxu0 0.0
        %361 = vmatpush.msra.mxu0 0.0
        %362 = vmatpush.msra.mxu0 0.0
        %363 = vmatpush.msra.mxu0 0.0
        %364 = vmatpush.msra.mxu0 0.0
        %365 = vmatpush.msra.mxu0 0.0
        %366 = vmatpush.msra.mxu0 0.0
        %367 = vmatpush.msra.mxu0 0.0
        %368 = vmatpush.msra.mxu0 0.0
        %369 = vmatpush.msra.mxu0 %v352
        %370 = vmatmul.f32.gmra.mxu0 %v350
        %v371 = vpop.f32.mrf.mxu0
        %v372 = vadd.f32 0.0, %v371
        %373 = vdwg.mxu0
        %v374 = vadd.f32 %v335, %v372
        %375 = vst [vmem:[#allocation3] sm:$0xff] %v374
        %v376 = vld [vmem:[#allocation3] sm:$0xff]
        %s377 = scalar_lea.vmem %s2, 24
        %v378 = vld [vmem:[%s377] sm:$0xff]
        %v379 = vld [vmem:[#allocation2] sm:$0xff]
        %381 = vst [vmem:[#allocation1] ss:$2 sm:$0xff] %v379
        %v382 = vld.sshfl [vmem:[#allocation1] sm:$0xff pattern:$0x75316420]
        %v383 = vld.sshfl [vmem:[#allocation1 + $0x8] sm:$0xff pattern:$0x75316420]
        %384 = vrot.lane.b32.xlu0 %v382, 125
        %v385 = vpop.permute.xlu0 %384
        %386 = vrot.lane.b32.xlu0 %v383, 125
        %v387 = vpop.permute.xlu0 %386
        %vm388 = vcmask 1022976
        %v389 = vsel %vm388, %v385, %v387
        %v391 = vsel %vm265, %v378, 0
        %v393 = vsel %vm269, %v389, 0
        %395 = vmatpush.msra.mxu0 0.0
        %396 = vmatpush.msra.mxu0 0.0
        %397 = vmatpush.msra.mxu0 0.0
        %398 = vmatpush.msra.mxu0 0.0
        %399 = vmatpush.msra.mxu0 0.0
        %400 = vmatpush.msra.mxu0 0.0
        %401 = vmatpush.msra.mxu0 0.0
        %402 = vmatpush.msra.mxu0 0.0
        %403 = vmatpush.msra.mxu0 0.0
        %404 = vmatpush.msra.mxu0 0.0
        %405 = vmatpush.msra.mxu0 0.0
        %406 = vmatpush.msra.mxu0 0.0
        %407 = vmatpush.msra.mxu0 0.0
        %408 = vmatpush.msra.mxu0 0.0
        %409 = vmatpush.msra.mxu0 0.0
        %410 = vmatpush.msra.mxu0 %v393
        %411 = vmatmul.f32.gmra.mxu0 %v391
        %v412 = vpop.f32.mrf.mxu0
        %v413 = vadd.f32 0.0, %v412
        %414 = vdwg.mxu0
        %v415 = vadd.f32 %v376, %v413
        %416 = vst [vmem:[#allocation3] sm:$0xff] %v415
        %v417 = vld [vmem:[#allocation3] sm:$0xff]
        %v418 = vld [vmem:[%s3] sm:$0xff]
        %420 = vset.pattern.permute.xlu0 0
        %421 = vperm.xlu0 %420, %v418
        %v422 = vpop.permute.xlu0 %421
        %v424 = vadd.f32 %v417, %v422
        %425 = vst [vmem:[%s240] sm:$0xff] %v424
        %s426 = sand.u32 %s140, 1
        %s427 = scalar_lea.sflag [#allocation5], %s426
        %s428 = sand.u32 %s140, 1
        %s429 = smul.addr %s428, 8
        %s430 = scalar_lea.vmem [#allocation4], %s429
        // Predicated region
        $region37: #{tpu_custom_call.1} parent=35 // pred_check
          %p431 = pneg %p150
        $region38: #{tpu_custom_call.1} parent=35 // pred_check_branch
          %433 = sbr.rel (%p431) target = $region40
        $region39: #{tpu_custom_call.1} parent=35 // pred_region
          %435 = vsyncadd %s427, 0
          %s436 = sadd.s32 %s23, %s22
          %s437 = smul.addr %s436, 8
          %s438 = scalar_lea.hbm %s4, %s437
          %s440 = sshll.u32 %s430, 4
          %s441 = int_to_ptr.vmem [resolvable:$true] %s440
          %s442 = sshll.u32 %s438, 4
          %s443 = int_to_ptr.hbm [resolvable:$true] %s442
          %445 = dma.vmem_to_hbm [thread:$0]  %s441, 128, %s443, %s427
        $region40: #{tpu_custom_call.1} parent=35 // pred_fallthru
          _
      $region36: #{tpu_custom_call.1} parent=5 // pred_fallthru
        _
      %p446 = scmp.le.s32.totalorder 2, %s13
      // Predicated region
      $region41: #{tpu_custom_call.1} parent=5 // pred_check
        %p447 = pneg %p446
      $region42: #{tpu_custom_call.1} parent=5 // pred_check_branch
        %449 = sbr.rel (%p447) target = $region44
      $region43: #{tpu_custom_call.1} parent=5 // pred_region
        %s450 = ssub.s32 %s13, 2
        // Predicated region
        $region45: #{tpu_custom_call.1} parent=43 // pred_check
          %p451 = pneg %p156
        $region46: #{tpu_custom_call.1} parent=43 // pred_check_branch
          %453 = sbr.rel (%p451) target = $region48
        $region47: #{tpu_custom_call.1} parent=43 // pred_region
          %s454 = sand.u32 %s141, 1
          %s455 = scalar_lea.sflag [#allocation5], %s454
          %s456 = sand.u32 %s141, 1
          %s457 = smul.addr %s456, 8
          %s458 = scalar_lea.vmem [#allocation4], %s457
          %460 = dma.done %s455, 128
        $region48: #{tpu_custom_call.1} parent=43 // pred_fallthru
          _
      $region44: #{tpu_custom_call.1} parent=5 // pred_fallthru
        _
    $region6: #{tpu_custom_call.1} parent=1 // loop_footer
      %s17 = sadd.s32 1, %s13
    $region7: #{tpu_custom_call.1} parent=1 // loop_footer_branch
      %12 = sbr.rel target = $region3
    $region8: #{tpu_custom_call.1} parent=1 // loop_exit
      _
    %461 = vsyncpa [#allocation5], 1
    %s462 = scalar_lea.sflag [#allocation5], 1
    %463 = vsyncpa %s462, 1

</llo_original>
